<compile_context>
chip_gen: v6e
topology: v6e:2x2x1
jax: 0.10.0
libtpu: 0.0.40
codegen_flags: <defaults>
</compile_context>

<pallas_src>
import functools

import jax
import jax.numpy as jnp
from jax import lax
from jax.experimental import pallas as pl
from jax.experimental.pallas import tpu as pltpu

IMAGE_SIZE = 288
LAMBDA_NOOBJ = 0.5
LAMBDA_COOR = 5.0
ANCHORS_DIMS = [[0.24, 0.24], [0.12, 0.12], [0.08, 0.08], [0.28, 0.28], [0.15, 0.15]]
NUM_LM = 68
LM_F = NUM_LM * 2
# rows per grid step; a (tile, 5) f32 block pads to 128 lanes in VMEM ->
# ~4 MiB/buffer, ~8 MiB double-buffered: safe on v5e/v6e/v7x with the limit below.
TILE_M_DEFAULT = 8192


def _cdiv(a, b):
    return -(-a // b)


# ----------------------------- Pallas kernel (dense hot path) -----------------------------
def _conf_sq_kernel(pred_ref, out_ref, *, m_total):
    """Accumulate sum(conf^2) over row tiles of the flattened (M, 5) prediction.

    out_ref is the lane-dense (8, 128) resident accumulator block; every lane
    holds the running sum (scalar broadcast-add), the wrapper reads [0, 0].
    Rows >= m_total (ragged last tile) are masked out.
    """
    t = pl.program_id(0)

    @pl.when(t == 0)
    def _init():
        out_ref[...] = jnp.zeros_like(out_ref)

    tile_m = pred_ref.shape[0]
    conf = pred_ref[:, 4:5].astype(jnp.float32)                      # (tile_m, 1)
    row = t * tile_m + lax.broadcasted_iota(jnp.int32, (tile_m, 1), 0)
    csq = jnp.where(row < m_total, conf * conf, 0.0)
    partial_sum = jnp.sum(csq, axis=0, keepdims=True)                # row-axis reduce only
    out_ref[...] += partial_sum                                      # broadcast into vreg


def _conf_sq_sum(pred_flat, m, tile_m=TILE_M_DEFAULT):
    """Pallas reduction: sum over all M grid cells of predicted-confidence^2."""
    if m <= tile_m:
        tile_m = m                     # single block; block dim == full array dim is legal
    n_tiles = _cdiv(m, tile_m)
    feat = pred_flat.shape[1]
    out = pl.pallas_call(
        functools.partial(_conf_sq_kernel, m_total=m),
        out_shape=jax.ShapeDtypeStruct((8, 128), jnp.float32),
        grid_spec=pltpu.PrefetchScalarGridSpec(
            num_scalar_prefetch=0,
            grid=(n_tiles,),
            in_specs=[pl.BlockSpec((tile_m, feat), lambda t: (t, 0))],
            out_specs=pl.BlockSpec((8, 128), lambda t: (0, 0)),
        ),
        compiler_params=pltpu.CompilerParams(
            dimension_semantics=("arbitrary",),
            vmem_limit_bytes=32 * 1024 * 1024),
        cost_estimate=pl.CostEstimate(
            flops=int(2 * m),
            transcendentals=0,
            bytes_accessed=int(m * feat * pred_flat.dtype.itemsize) + 8 * 128 * 4),
    )(pred_flat)
    return out[0, 0]


# ----------------------------- glue helpers (plain JAX, tiny shapes) -----------------------------
def _anchor_boxes():
    return jnp.array([[0.5, 0.5, w, h] for (w, h) in ANCHORS_DIMS], dtype=jnp.float32)


def _format_bbox(box):
    # [cx, cy, w, h] -> columns [x1, x2, y1, y2] (same column order as the torch code)
    x1 = box[:, 0] - box[:, 2] / 2.0
    x2 = box[:, 0] + box[:, 2] / 2.0
    y1 = box[:, 1] - box[:, 3] / 2.0
    y2 = box[:, 1] + box[:, 3] / 2.0
    return jnp.stack([x1, x2, y1, y2], axis=1)


def _get_iou(box1, box2):
    b1 = _format_bbox(box1)
    b2 = _format_bbox(box2)
    ix1 = jnp.maximum(b1[:, 0], b2[:, 0])
    iy1 = jnp.maximum(b1[:, 2], b2[:, 2])
    ix2 = jnp.minimum(b1[:, 1], b2[:, 1])
    iy2 = jnp.minimum(b1[:, 3], b2[:, 3])
    inter = (ix2 - ix1 + 1.0) * (iy2 - iy1 + 1.0)
    a1 = (b1[:, 1] - b1[:, 0] + 1.0) * (b1[:, 3] - b1[:, 2] + 1.0)
    a2 = (b2[:, 1] - b2[:, 0] + 1.0) * (b2[:, 3] - b2[:, 2] + 1.0)
    return inter / (a1 + a2 - inter + 1e-16)


def _iou_vs_many(gt_row, many):
    return _get_iou(gt_row[None, :], many)


# ----------------------------- forward -----------------------------
def joint_loss(bbox_prediction, landmarks_prediction, bbox_target, landmarks_target,
               tile_m=TILE_M_DEFAULT):
    """Returns (nme, loc_loss, conf_loss, best_pred_bboxes)."""
    B, G, _, A, _ = bbox_prediction.shape
    T = bbox_target.shape[1]
    M = B * G * G * A
    anchors = _anchor_boxes()

    # ---- vectorized target -> cell matching (replaces the torch B*T python loop) ----
    tgt = bbox_target.astype(jnp.float32)                         # (B, T, 5)  tiny
    lm_tgt = landmarks_target.reshape(B, T, LM_F).astype(jnp.float32)

    valid = jnp.sum(tgt, axis=-1) != 0                            # (B, T)
    gx = tgt[..., 0] * G
    gy = tgt[..., 1] * G
    gw = tgt[..., 2]
    gh = tgt[..., 3]
    gi_raw = gx.astype(jnp.int32)                                 # trunc like python int()
    gj_raw = gy.astype(jnp.int32)
    fx = gx - gi_raw.astype(jnp.float32)
    fy = gy - gj_raw.astype(jnp.float32)
    gi = jnp.clip(gi_raw, 0, G - 1)                               # safe gather indices
    gj = jnp.clip(gj_raw, 0, G - 1)

    gt_box_cell = jnp.stack([fx, fy, gw, gh], axis=-1)            # (B, T, 4) raw cell coords
    anchor_iou = jax.vmap(jax.vmap(lambda g: _iou_vs_many(g, anchors)))(gt_box_cell)
    best_a = jnp.argmax(anchor_iou, axis=-1).astype(jnp.int32)    # (B, T)
    gt_box_log = jnp.log1p(gt_box_cell)                           # (B, T, 4)

    # last-writer dedup: later valid targets landing in the same cell overwrite
    # earlier ones (mirrors the sequential torch loop).  Obj cells == last writers.
    b_idx = jnp.broadcast_to(jnp.arange(B, dtype=jnp.int32)[:, None], (B, T))
    flat_idx = ((b_idx * G + gj) * G + gi) * A + best_a           # (B, T)
    t_ar = jnp.arange(T)
    same_cell = flat_idx[:, :, None] == flat_idx[:, None, :]      # (B, T, T)
    later_valid = valid[:, None, :] & (t_ar[None, None, :] > t_ar[None, :, None])
    overwritten = jnp.any(same_cell & later_valid, axis=-1)       # (B, T)
    write = valid & ~overwritten                                  # one True per obj cell
    wmask = write.astype(jnp.float32)
    n_obj = jnp.sum(wmask)

    # ---- tiny gathers of the predictions at the matched cells (native dtype -> f32 after gather) ----
    cell_pred = bbox_prediction[b_idx, gj, gi].astype(jnp.float32)           # (B, T, A, 5)
    sel_pred = bbox_prediction[b_idx, gj, gi, best_a].astype(jnp.float32)    # (B, T, 5)
    sel_lm_pred = landmarks_prediction[b_idx, gj, gi, best_a]
    sel_lm_pred = sel_lm_pred.reshape(B, T, LM_F).astype(jnp.float32)        # (B, T, 136)

    n_obj_safe = jnp.maximum(n_obj, 1.0)                          # guard: all targets padded
    n_noobj_safe = jnp.maximum(jnp.float32(M) - n_obj, 1.0)

    # ---- localization loss: SmoothL1 over obj cells only ----
    d = sel_pred[..., :4] - gt_box_log
    ad = jnp.abs(d)
    sl1 = jnp.where(ad < 1.0, 0.5 * d * d, ad - 0.5)
    loc_loss = LAMBDA_COOR * jnp.sum(sl1 * wmask[..., None]) / (4.0 * n_obj_safe)

    # ---- confidence loss ----
    conf_sel = sel_pred[..., 4]                                   # (B, T)
    sum_sq_obj = jnp.sum(jnp.where(write, (conf_sel - 1.0) ** 2, 0.0))
    sum_sq_obj_raw = jnp.sum(jnp.where(write, conf_sel * conf_sel, 0.0))
    # dense part (the only O(M) term): sum over every cell of conf^2 -> Pallas kernel.
    pred_flat = bbox_prediction.reshape(M, bbox_prediction.shape[-1])  # free reshape, no cast
    sum_sq_all = _conf_sq_sum(pred_flat, M, tile_m=tile_m)
    sum_sq_noobj = sum_sq_all - sum_sq_obj_raw
    conf_loss = (LAMBDA_NOOBJ * sum_sq_noobj / n_noobj_safe
                 + sum_sq_obj / n_obj_safe)

    # ---- NME over obj cells only ----
    diff = lm_tgt - sel_lm_pred
    dist = jnp.sqrt(jnp.sum(diff * diff, axis=-1))                # (B, T)
    wh = gt_box_log[..., 2] * gt_box_log[..., 3]                  # log1p(w)*log1p(h), as in torch ref
    nme_terms = jnp.where(write, dist / jnp.sqrt(wh), 0.0)        # where selects -> masked rows safe
    nme = jnp.sum(nme_terms) / (float(IMAGE_SIZE) * float(NUM_LM) * n_obj_safe)

    # ---- best predicted bbox per valid target (for metrics) ----
    pred_iou = jax.vmap(jax.vmap(_iou_vs_many))(gt_box_log, cell_pred[..., :4])  # (B, T, A)
    best_p = jnp.argmax(pred_iou, axis=-1)
    t_idx = jnp.broadcast_to(jnp.arange(T, dtype=jnp.int32)[None, :], (B, T))
    bb = cell_pred[b_idx, t_idx, best_p]                          # (B, T, 5)
    best_box = _format_bbox(bb[..., :4].reshape(B * T, 4)).reshape(B, T, 4)
    best_row = jnp.concatenate([best_box, bb[..., 4:5]], axis=-1)  # (B, T, 5)
    best_pred = jnp.where(valid[..., None], best_row, 0.0)

    return nme, loc_loss, conf_loss, best_pred


# ----------------------------- driver -----------------------------
if __name__ == "__main__":
    B, T, G, A = 2, 3, 4, 5   # batch, max faces, grid, anchors

    key = jax.random.PRNGKey(0)
    k1, k2, k3, k4, k5 = jax.random.split(key, 5)

    # predictions (the detector's raw outputs)
    bbox_prediction = 0.1 * jax.random.normal(k1, (B, G, G, A, 5), jnp.float32)
    landmarks_prediction = 0.5 + 0.05 * jax.random.normal(
        k2, (B, G, G, A, NUM_LM, 2), jnp.float32)

    # targets: [cx, cy, w, h, conf] with coords in (0, 1); one padded (all-zero) slot
    centers = 0.15 + 0.7 * jax.random.uniform(k3, (B, T, 2), jnp.float32)
    wh = 0.1 + 0.2 * jax.random.uniform(k4, (B, T, 2), jnp.float32)
    bbox_target = jnp.concatenate(
        [centers, wh, jnp.ones((B, T, 1), jnp.float32)], axis=-1)
    bbox_target = bbox_target.at[1, 2].set(0.0)          # empty / padded face slot
    landmarks_target = jax.random.uniform(k5, (B, T, NUM_LM, 2), jnp.float32)

    fwd = jax.jit(joint_loss)
    nme, loc_loss, conf_loss, best_pred = fwd(
        bbox_prediction, landmarks_prediction, bbox_target, landmarks_target)
    jax.block_until_ready((nme, loc_loss, conf_loss, best_pred))
    print("KERNEL_OK")
</pallas_src>

<mosaic_0001>
module attributes {stable_mosaic.version = 11 : i64} {
  func.func @_conf_sq_kernel(%arg0: i32, %arg1: memref<160x5xf32, #tpu.memory_space<vmem>>, %arg2: memref<8x128xf32, #tpu.memory_space<vmem>>) attributes {dimension_semantics = [#tpu.dimension_semantics<arbitrary>], iteration_bounds = array<i64: 1>, scalar_prefetch = 0 : i64, scratch_operands = 0 : i64, tpu.core_type = #tpu.core_type<tc>, window_params = [{transform_indices = @transform_0, window_bounds = array<i64: 160, 5>}, {pipeline_mode = #tpu.pipeline_mode<synchronous>, transform_indices = @transform_1, window_bounds = array<i64: 8, 128>}]} {
    %c0_i32 = arith.constant 0 : i32
    %0 = arith.cmpi eq, %arg0, %c0_i32 : i32
    %1 = arith.extui %0 : i1 to i32
    %c0_i32_0 = arith.constant 0 : i32
    %2 = arith.cmpi ne, %1, %c0_i32_0 : i32
    scf.if %2 {
      %cst_7 = arith.constant 0.000000e+00 : f32
      %19 = vector.broadcast %cst_7 : f32 to vector<8x128xf32>
      %c0_8 = arith.constant 0 : index
      %c0_9 = arith.constant 0 : index
      %20 = vector.load %arg2[%c0_8, %c0_9] : memref<8x128xf32, #tpu.memory_space<vmem>>, vector<8x128xf32>
      tpu.vector_store %arg2[%c0_8, %c0_9], %19 {strides = array<i32>} : memref<8x128xf32, #tpu.memory_space<vmem>>, vector<8x128xf32>,
    } else {
    }
    %c0 = arith.constant 0 : index
    %c4 = arith.constant 4 : index
    %3 = vector.load %arg1[%c0, %c4] : memref<160x5xf32, #tpu.memory_space<vmem>>, vector<160x1xf32>
    %c160_i32 = arith.constant 160 : i32
    %4 = arith.muli %arg0, %c160_i32 : i32
    %5 = tpu.iota {dimensions = array<i32: 0>} : vector<160x1xi32>
    %6 = vector.broadcast %4 : i32 to vector<160x1xi32>
    %7 = arith.addi %6, %5 : vector<160x1xi32>
    %c160_i32_1 = arith.constant 160 : i32
    %8 = vector.broadcast %c160_i32_1 : i32 to vector<160x1xi32>
    %9 = arith.cmpi slt, %7, %8 : vector<160x1xi32>
    %10 = arith.mulf %3, %3 : vector<160x1xf32>
    %cst = arith.constant 0.000000e+00 : f32
    %11 = vector.broadcast %cst : f32 to vector<160x1xf32>
    %12 = arith.select %9, %10, %11 : vector<160x1xi1>, vector<160x1xf32>
    %cst_2 = arith.constant dense<0.000000e+00> : vector<1xf32>
    %13 = vector.multi_reduction <add>, %12, %cst_2 [0] : vector<160x1xf32> to vector<1xf32>
    %14 = vector.shape_cast %13 : vector<1xf32> to vector<1x1xf32>
    %c0_3 = arith.constant 0 : index
    %c0_4 = arith.constant 0 : index
    %15 = vector.load %arg2[%c0_3, %c0_4] : memref<8x128xf32, #tpu.memory_space<vmem>>, vector<8x128xf32>
    %16 = vector.broadcast %14 : vector<1x1xf32> to vector<8x128xf32>
    %17 = arith.addf %15, %16 : vector<8x128xf32>
    %c0_5 = arith.constant 0 : index
    %c0_6 = arith.constant 0 : index
    %18 = vector.load %arg2[%c0_5, %c0_6] : memref<8x128xf32, #tpu.memory_space<vmem>>, vector<8x128xf32>
    tpu.vector_store %arg2[%c0_5, %c0_6], %17 {strides = array<i32>} : memref<8x128xf32, #tpu.memory_space<vmem>>, vector<8x128xf32>,
    return
  }
  func.func @transform_0(%arg0: i32) -> (i32, i32) {
    %c0_i32 = arith.constant 0 : i32
    %c0_i32_0 = arith.constant 0 : i32
    return %arg0, %c0_i32 : i32, i32
  }
  func.func @transform_1(%arg0: i32) -> (i32, i32) {
    %c0_i32 = arith.constant 0 : i32
    %c0_i32_0 = arith.constant 0 : i32
    %c0_i32_1 = arith.constant 0 : i32
    return %c0_i32, %c0_i32_0 : i32, i32
  }
}

</mosaic_0001>

<llo_original>
// kernel: joint_loss.1
$region0: #{joint_loss.1}
  #allocation0 [shape = 'u32[]', space=smem, size = 0x4, offset = 0x4, fixed_abs, tag = 'smem constant byte address 0x4 - core index']
  #allocation1 [shape = 'u32[144,128]{1,0:T(1,128)}', space=vmem, size = 0x12000, scoped, tag = 'internal scratch']
  %s0 = inlined_call_operand.vmem [shape: f32[160,5], index: 0, kind: input, shape index: {}]
  %s1 = inlined_call_operand.vmem [shape: f32[8,128], index: 1, kind: output, shape index: {}]
  %s2 = sld [smem:[#allocation0]]
  $region18: #{joint_loss.1} parent=0
    _
  %s4 = ssub.s32 1, %s2
  %s5 = scalar_select 0, %s4, %s2
  // Predicated region
  $region2: #{joint_loss.1} parent=0 // pred_check
    _
  $region3: #{joint_loss.1} parent=0 // pred_check_branch
    %7 = sbr.rel (0) target = $region5
  $region4: #{joint_loss.1} parent=0 // pred_region
    _
  $region5: #{joint_loss.1} parent=0 // pred_fallthru
    _
  %p8 = scmp.eq.s32.totalorder 0, 0
  // Predicated region
  $region6: #{joint_loss.1} parent=0 // pred_check
    %p9 = pneg %p8
  $region7: #{joint_loss.1} parent=0 // pred_check_branch
    %11 = sbr.rel (%p9) target = $region9
  $region8: #{joint_loss.1} parent=0 // pred_region
    %12 = vst [vmem:[%s1] sm:$0xff] 0.0
  $region9: #{joint_loss.1} parent=0 // pred_fallthru
    _
  %v13 = vld [vmem:[%s0] sm:$0xff]
  %v14 = vld [vmem:[%s0 + $0x8] sm:$0xff]
  %v15 = vld [vmem:[%s0 + $0x10] sm:$0xff]
  %v16 = vld [vmem:[%s0 + $0x18] sm:$0xff]
  %v17 = vld [vmem:[%s0 + $0x20] sm:$0xff]
  %v18 = vld [vmem:[%s0 + $0x28] sm:$0xff]
  %v19 = vld [vmem:[%s0 + $0x30] sm:$0xff]
  %v20 = vld [vmem:[%s0 + $0x38] sm:$0xff]
  %v21 = vld [vmem:[%s0 + $0x40] sm:$0xff]
  %v22 = vld [vmem:[%s0 + $0x48] sm:$0xff]
  %v23 = vld [vmem:[%s0 + $0x50] sm:$0xff]
  %v24 = vld [vmem:[%s0 + $0x58] sm:$0xff]
  %v25 = vld [vmem:[%s0 + $0x60] sm:$0xff]
  %v26 = vld [vmem:[%s0 + $0x68] sm:$0xff]
  %v27 = vld [vmem:[%s0 + $0x70] sm:$0xff]
  %v28 = vld [vmem:[%s0 + $0x78] sm:$0xff]
  %v29 = vld [vmem:[%s0 + $0x80] sm:$0xff]
  %v30 = vld [vmem:[%s0 + $0x88] sm:$0xff]
  %v31 = vld [vmem:[%s0 + $0x90] sm:$0xff]
  %v32 = vld [vmem:[%s0 + $0x98] sm:$0xff]
  %s33 = smul.u32 0, 160
  %v34 = vlaneseq
  %v35 = vshrl.u32 %v34, 7
  %v36 = vadd.s32 %v35, 8
  %v37 = vadd.s32 %v35, 16
  %v38 = vadd.s32 %v35, 24
  %v39 = vadd.s32 %v35, 32
  %v40 = vadd.s32 %v35, 40
  %v41 = vadd.s32 %v35, 48
  %v42 = vadd.s32 %v35, 56
  %v43 = vadd.s32 %v35, 64
  %v44 = vadd.s32 %v35, 72
  %v45 = vadd.s32 %v35, 80
  %v46 = vadd.s32 %v35, 88
  %v47 = vadd.s32 %v35, 96
  %v48 = vadd.s32 %v35, 104
  %v49 = vadd.s32 %v35, 112
  %v50 = vadd.s32 %v35, 120
  %v51 = vadd.s32 %v35, 128
  %v52 = vadd.s32 %v35, 136
  %v53 = vadd.s32 %v35, 144
  %v54 = vadd.s32 %v35, 152
  %v55 = vstv %s33
  %v56 = vadd.s32 %v55, %v35
  %v57 = vadd.s32 %v55, %v36
  %v58 = vadd.s32 %v55, %v37
  %v59 = vadd.s32 %v55, %v38
  %v60 = vadd.s32 %v55, %v39
  %v61 = vadd.s32 %v55, %v40
  %v62 = vadd.s32 %v55, %v41
  %v63 = vadd.s32 %v55, %v42
  %v64 = vadd.s32 %v55, %v43
  %v65 = vadd.s32 %v55, %v44
  %v66 = vadd.s32 %v55, %v45
  %v67 = vadd.s32 %v55, %v46
  %v68 = vadd.s32 %v55, %v47
  %v69 = vadd.s32 %v55, %v48
  %v70 = vadd.s32 %v55, %v49
  %v71 = vadd.s32 %v55, %v50
  %v72 = vadd.s32 %v55, %v51
  %v73 = vadd.s32 %v55, %v52
  %v74 = vadd.s32 %v55, %v53
  %v75 = vadd.s32 %v55, %v54
  %vm76 = vcmp.lt.s32.totalorder %v56, 160
  %vm77 = vcmp.lt.s32.totalorder %v57, 160
  %vm78 = vcmp.lt.s32.totalorder %v58, 160
  %vm79 = vcmp.lt.s32.totalorder %v59, 160
  %vm80 = vcmp.lt.s32.totalorder %v60, 160
  %vm81 = vcmp.lt.s32.totalorder %v61, 160
  %vm82 = vcmp.lt.s32.totalorder %v62, 160
  %vm83 = vcmp.lt.s32.totalorder %v63, 160
  %vm84 = vcmp.lt.s32.totalorder %v64, 160
  %vm85 = vcmp.lt.s32.totalorder %v65, 160
  %vm86 = vcmp.lt.s32.totalorder %v66, 160
  %vm87 = vcmp.lt.s32.totalorder %v67, 160
  %vm88 = vcmp.lt.s32.totalorder %v68, 160
  %vm89 = vcmp.lt.s32.totalorder %v69, 160
  %vm90 = vcmp.lt.s32.totalorder %v70, 160
  %vm91 = vcmp.lt.s32.totalorder %v71, 160
  %vm92 = vcmp.lt.s32.totalorder %v72, 160
  %vm93 = vcmp.lt.s32.totalorder %v73, 160
  %vm94 = vcmp.lt.s32.totalorder %v74, 160
  %vm95 = vcmp.lt.s32.totalorder %v75, 160
  %v96 = vmul.f32 %v13, %v13
  %v97 = vmul.f32 %v14, %v14
  %v98 = vmul.f32 %v15, %v15
  %v99 = vmul.f32 %v16, %v16
  %v100 = vmul.f32 %v17, %v17
  %v101 = vmul.f32 %v18, %v18
  %v102 = vmul.f32 %v19, %v19
  %v103 = vmul.f32 %v20, %v20
  %v104 = vmul.f32 %v21, %v21
  %v105 = vmul.f32 %v22, %v22
  %v106 = vmul.f32 %v23, %v23
  %v107 = vmul.f32 %v24, %v24
  %v108 = vmul.f32 %v25, %v25
  %v109 = vmul.f32 %v26, %v26
  %v110 = vmul.f32 %v27, %v27
  %v111 = vmul.f32 %v28, %v28
  %v112 = vmul.f32 %v29, %v29
  %v113 = vmul.f32 %v30, %v30
  %v114 = vmul.f32 %v31, %v31
  %v115 = vmul.f32 %v32, %v32
  %v116 = vsel %vm76, %v96, 0.0
  %v117 = vsel %vm77, %v97, 0.0
  %v118 = vsel %vm78, %v98, 0.0
  %v119 = vsel %vm79, %v99, 0.0
  %v120 = vsel %vm80, %v100, 0.0
  %v121 = vsel %vm81, %v101, 0.0
  %v122 = vsel %vm82, %v102, 0.0
  %v123 = vsel %vm83, %v103, 0.0
  %v124 = vsel %vm84, %v104, 0.0
  %v125 = vsel %vm85, %v105, 0.0
  %v126 = vsel %vm86, %v106, 0.0
  %v127 = vsel %vm87, %v107, 0.0
  %v128 = vsel %vm88, %v108, 0.0
  %v129 = vsel %vm89, %v109, 0.0
  %v130 = vsel %vm90, %v110, 0.0
  %v131 = vsel %vm91, %v111, 0.0
  %v132 = vsel %vm92, %v112, 0.0
  %v133 = vsel %vm93, %v113, 0.0
  %v134 = vsel %vm94, %v114, 0.0
  %v135 = vsel %vm95, %v115, 0.0
  %vm136 = vcmask 39968
  %v137 = vsel %vm136, %v116, 0.0
  %v138 = vsel %vm136, %v117, 0.0
  %v139 = vadd.f32 %v137, %v138
  %v140 = vsel %vm136, %v118, 0.0
  %v141 = vadd.f32 %v139, %v140
  %v142 = vsel %vm136, %v119, 0.0
  %v143 = vadd.f32 %v141, %v142
  %v144 = vsel %vm136, %v120, 0.0
  %v145 = vadd.f32 %v143, %v144
  %v146 = vsel %vm136, %v121, 0.0
  %v147 = vadd.f32 %v145, %v146
  %v148 = vsel %vm136, %v122, 0.0
  %v149 = vadd.f32 %v147, %v148
  %v150 = vsel %vm136, %v123, 0.0
  %v151 = vadd.f32 %v149, %v150
  %v152 = vsel %vm136, %v124, 0.0
  %v153 = vadd.f32 %v151, %v152
  %v154 = vsel %vm136, %v125, 0.0
  %v155 = vadd.f32 %v153, %v154
  %v156 = vsel %vm136, %v126, 0.0
  %v157 = vadd.f32 %v155, %v156
  %v158 = vsel %vm136, %v127, 0.0
  %v159 = vadd.f32 %v157, %v158
  %v160 = vsel %vm136, %v128, 0.0
  %v161 = vadd.f32 %v159, %v160
  %v162 = vsel %vm136, %v129, 0.0
  %v163 = vadd.f32 %v161, %v162
  %v164 = vsel %vm136, %v130, 0.0
  %v165 = vadd.f32 %v163, %v164
  %v166 = vsel %vm136, %v131, 0.0
  %v167 = vadd.f32 %v165, %v166
  %v168 = vsel %vm136, %v132, 0.0
  %v169 = vadd.f32 %v167, %v168
  %v170 = vsel %vm136, %v133, 0.0
  %v171 = vadd.f32 %v169, %v170
  %v172 = vsel %vm136, %v134, 0.0
  %v173 = vadd.f32 %v171, %v172
  %v174 = vsel %vm136, %v135, 0.0
  %v175 = vadd.f32 %v173, %v174
  %v176 = vrot.slane %v175, 4
  %v177 = vadd.f32 %v175, %v176
  %v178 = vrot.slane %v177, 2
  %v179 = vadd.f32 %v177, %v178
  %v180 = vrot.slane %v179, 1
  %v181 = vadd.f32 %v179, %v180
  %v182 = vld [vmem:[%s1] sm:$0xff]
  %184 = vset.pattern.permute.xlu0 4
  %185 = vperm.xlu0 %184, %v181
  %v186 = vpop.permute.xlu0 %185
  %v188 = vadd.f32 %v182, %v186
  %189 = vst [vmem:[%s1] sm:$0xff] %v188
  // Predicated region
  $region10: #{joint_loss.1} parent=0 // pred_check
    _
  $region11: #{joint_loss.1} parent=0 // pred_check_branch
    %191 = sbr.rel (0) target = $region13
  $region12: #{joint_loss.1} parent=0 // pred_region
    _
  $region13: #{joint_loss.1} parent=0 // pred_fallthru
    _
  // Predicated region
  $region14: #{joint_loss.1} parent=0 // pred_check
    _
  $region15: #{joint_loss.1} parent=0 // pred_check_branch
    %193 = sbr.rel (0) target = $region17
  $region16: #{joint_loss.1} parent=0 // pred_region
    _
  $region17: #{joint_loss.1} parent=0 // pred_fallthru
    _

</llo_original>
